<compile_context>
chip_gen: v5e
topology: v5e:2x2
jax: 0.10.0
libtpu: 0.0.40
codegen_flags: <defaults>
</compile_context>

<pallas_src>
import functools

import jax
import jax.numpy as jnp
from jax.experimental import pallas as pl
from jax.experimental.pallas import tpu as pltpu

LANE = 128      # vreg lane width (fast axis)
SUBLANE = 8     # vreg sublane count (slow axis)


def _round_up(v, m):
    return ((v + m - 1) // m) * m


def _vmem_capacity_bytes():
    try:
        return int(pltpu.get_tpu_info().vmem_capacity_bytes)
    except Exception:
        return 64 * 1024 * 1024  # conservative: v7x per-TC VMEM


def _mlp_fused_kernel(x_ref, *refs, num_layers, sigmoid_output, mxu_dtype):
    """Fused MLP: every layer's matmul + bias + ReLU (+ sigmoid) in one kernel.

    refs = (w0, b0, w1, b1, ..., w_{L-1}, b_{L-1}, o_ref).
    The running activation stays resident in VMEM/vregs between layers.
    """
    o_ref = refs[-1]
    wb = refs[:-1]
    h = x_ref[...]                                        # (tm, K0), already mxu_dtype
    for i in range(num_layers):
        w = wb[2 * i][...]                                # (K_i, N_i) mxu_dtype
        b = wb[2 * i + 1][...]                            # (1,  N_i) f32
        lhs = h if h.dtype == mxu_dtype else h.astype(mxu_dtype)
        acc = jnp.dot(lhs, w, preferred_element_type=jnp.float32)   # MXU, f32 acc
        acc = acc + b                                     # f32 epilogue (v5e-safe)
        if i < num_layers - 1:
            acc = jnp.maximum(acc, 0.0)                   # ReLU on hidden layers
        elif sigmoid_output:
            acc = jax.nn.sigmoid(acc)                     # optional final sigmoid
        h = acc
    o_ref[...] = h.astype(o_ref.dtype)                    # lane-dense store


def mlp_ref(x, params, sigmoid_output=False):
    """Plain-JAX f32 reference (same math as the PyTorch module)."""
    num_layers = len(params)
    h = x
    for i, (w, b) in enumerate(params):
        h = h @ w + b
        if i < num_layers - 1:
            h = jnp.maximum(h, 0.0)
    if sigmoid_output:
        h = jax.nn.sigmoid(h)
    return h


def mlp_forward(x, params, sigmoid_output=False, *, block_m=512,
                mxu_dtype=jnp.bfloat16, out_dtype=None, force_pallas=False):
    """Pallas-fused equivalent of MLP.forward. x may have arbitrary leading dims."""
    *lead, in_dim = x.shape
    num_layers = len(params)
    out_dim = params[-1][1].shape[0]
    mxu_dtype = jnp.dtype(mxu_dtype)
    out_dtype = jnp.dtype(out_dtype) if out_dtype is not None else jnp.dtype(x.dtype)

    x2 = x.reshape(-1, in_dim)
    M = x2.shape[0]
    widths = [w.shape[1] for (w, _) in params]

    # Tiny problems are pure pallas_call launch overhead -> let XLA fuse them.
    if not force_pallas and M * (in_dim + sum(widths)) < (1 << 16):
        return mlp_ref(x2.astype(jnp.float32), params,
                       sigmoid_output).astype(out_dtype).reshape(*lead, out_dim)

    # Lane-dense padding of every layer width (exact: zeros propagate through
    # matmul / bias / ReLU; padded final columns are sliced off below).
    n_pads = [_round_up(n, LANE) for n in widths]
    k_pads = [in_dim] + n_pads[:-1]

    flat_inputs = []
    for i, (w, b) in enumerate(params):
        k_i, n_i = w.shape
        kp, np_ = k_pads[i], n_pads[i]
        if (kp, np_) != (k_i, n_i):
            w = jnp.pad(w, ((0, kp - k_i), (0, np_ - n_i)))
        if np_ != n_i:
            b = jnp.pad(b, (0, np_ - n_i))
        flat_inputs.append(w.astype(mxu_dtype))                  # MXU operand
        flat_inputs.append(b.reshape(1, np_).astype(jnp.float32))  # f32 epilogue

    vmem_cap = _vmem_capacity_bytes()
    w_bytes = sum(int(w.size) * w.dtype.itemsize for w in flat_inputs[0::2])
    b_bytes = sum(SUBLANE * int(b.shape[1]) * 4 for b in flat_inputs[1::2])
    if (w_bytes + b_bytes) > int(0.6 * vmem_cap):
        # TODO(synk): add an N-tiled (grid over output columns, f32 VMEM
        # accumulator) variant for MLPs whose weights exceed VMEM; fall back to
        # XLA for now so we never silently spill.
        return mlp_ref(x2.astype(jnp.float32), params,
                       sigmoid_output).astype(out_dtype).reshape(*lead, out_dim)

    # M tiling: whole batch as one block when small; otherwise at least two
    # blocks so the "parallel" axis can shard across v7x's 2 TensorCores.
    if M <= block_m:
        tm = M
    else:
        tm = max(SUBLANE, min(block_m, _round_up(pl.cdiv(M, 2), SUBLANE)))
    grid_m = pl.cdiv(M, tm)
    n_last = n_pads[-1]

    # Stream the input tile already in the MXU operand dtype (bf16 by default).
    x_stream = x2.astype(mxu_dtype)

    kernel = functools.partial(
        _mlp_fused_kernel, num_layers=num_layers,
        sigmoid_output=sigmoid_output, mxu_dtype=mxu_dtype,
    )

    def _vmem_budget(wb_buf_count):
        in_bytes = 2 * tm * _round_up(in_dim, LANE) * mxu_dtype.itemsize
        out_bytes = 2 * tm * n_last * out_dtype.itemsize
        act_bytes = 2 * tm * max(n_pads) * 4             # f32 intermediates headroom
        total = wb_buf_count * (w_bytes + b_bytes) + in_bytes + out_bytes + act_bytes
        return int(total * 1.25) + (4 << 20)

    def _run(single_buffer_weights):
        wspec_kwargs = {}
        if single_buffer_weights and hasattr(pl, "Buffered"):
            # Constant index_map -> data DMA'd once; no need to double-buffer.
            wspec_kwargs["pipeline_mode"] = pl.Buffered(1)
        in_specs = [pl.BlockSpec((tm, in_dim), lambda i: (i, 0))]
        for w, b2 in zip(flat_inputs[0::2], flat_inputs[1::2]):
            in_specs.append(pl.BlockSpec(w.shape, lambda i: (0, 0), **wspec_kwargs))
            in_specs.append(pl.BlockSpec(b2.shape, lambda i: (0, 0), **wspec_kwargs))
        budget = _vmem_budget(1 if single_buffer_weights else 2)
        vmem_limit = min(max(budget, 16 << 20), int(0.85 * vmem_cap))
        return pl.pallas_call(
            kernel,
            out_shape=jax.ShapeDtypeStruct((M, n_last), out_dtype),
            grid=(grid_m,),
            in_specs=in_specs,
            out_specs=pl.BlockSpec((tm, n_last), lambda i: (i, 0)),
            compiler_params=pltpu.CompilerParams(
                dimension_semantics=("parallel",),   # shard M across TCs (v7x)
                vmem_limit_bytes=vmem_limit,
            ),
        )(x_stream, *flat_inputs)

    try:
        out = _run(True)
    except Exception:
        out = _run(False)   # retry with default double-buffered weight specs

    out = out[:, :out_dim]
    return out.reshape(*lead, out_dim)


def init_mlp_params(key, input_dim, hidden_dim, output_dim, num_layers,
                    dtype=jnp.float32):
    """Deterministic init matching nn.Linear shapes (weights stored as [in, out])."""
    h = [hidden_dim] * (num_layers - 1)
    dims_in = [input_dim] + h
    dims_out = h + [output_dim]
    params = []
    for n, k in zip(dims_in, dims_out):
        key, kw, kb = jax.random.split(key, 3)
        bound = 1.0 / jnp.sqrt(jnp.asarray(n, dtype))
        w = jax.random.uniform(kw, (n, k), dtype, minval=-bound, maxval=bound)
        b = jax.random.uniform(kb, (k,), dtype, minval=-bound, maxval=bound)
        params.append((w, b))
    return params


if __name__ == "__main__":
    # Shapes consistent with the module: tokens (2, 8) x input_dim=32,
    # hidden_dim=32, output_dim=16, num_layers=3.
    key = jax.random.PRNGKey(0)
    key, kx, kb = jax.random.split(key, 3)

    input_dim, hidden_dim, output_dim, num_layers = 32, 32, 16, 3
    x = jax.random.normal(kx, (2, 8, input_dim), dtype=jnp.float32)
    params = init_mlp_params(key, input_dim, hidden_dim, output_dim, num_layers)

    # 1) Pallas path, bf16 MXU operands (force_pallas so the kernel really runs).
    out = jax.block_until_ready(mlp_forward(x, params, force_pallas=True))
    ref = mlp_ref(x, params)
    assert out.shape == (2, 8, output_dim), out.shape
    assert jnp.allclose(out, ref, atol=2e-2, rtol=2e-2), float(jnp.max(jnp.abs(out - ref)))

    # 2) sigmoid_output=True path.
    out_s = jax.block_until_ready(mlp_forward(x, params, sigmoid_output=True,
                                              force_pallas=True))
    ref_s = mlp_ref(x, params, sigmoid_output=True)
    assert jnp.allclose(out_s, ref_s, atol=2e-2, rtol=2e-2), float(
        jnp.max(jnp.abs(out_s - ref_s)))

    # 3) f32-operand parity path (exact match with the PyTorch f32 module math).
    out_f32 = jax.block_until_ready(
        mlp_forward(x, params, mxu_dtype=jnp.float32, force_pallas=True))
    assert jnp.allclose(out_f32, ref, atol=1e-5, rtol=1e-5), float(
        jnp.max(jnp.abs(out_f32 - ref)))

    # 4) M > block_m: exercises grid_m >= 2 and a partial (masked) last M tile.
    x_big = jax.random.normal(kb, (600, input_dim), dtype=jnp.float32)
    out_big = jax.block_until_ready(
        mlp_forward(x_big, params, block_m=512, force_pallas=True))
    ref_big = mlp_ref(x_big, params)
    assert out_big.shape == (600, output_dim), out_big.shape
    assert jnp.allclose(out_big, ref_big, atol=2e-2, rtol=2e-2), float(
        jnp.max(jnp.abs(out_big - ref_big)))

    # 5) Auto-dispatch path (tiny problem -> plain JAX); must still be correct.
    out_auto = jax.block_until_ready(mlp_forward(x, params))
    assert jnp.allclose(out_auto, ref, atol=1e-5, rtol=1e-5)

    print("KERNEL_OK")
</pallas_src>

<mosaic_0001>
module attributes {stable_mosaic.version = 11 : i64} {
  func.func @_mlp_fused_kernel(%arg0: i32, %arg1: memref<16x32xbf16, #tpu.memory_space<vmem>>, %arg2: memref<32x128xbf16, #tpu.memory_space<vmem>>, %arg3: memref<1x128xf32, #tpu.memory_space<vmem>>, %arg4: memref<128x128xbf16, #tpu.memory_space<vmem>>, %arg5: memref<1x128xf32, #tpu.memory_space<vmem>>, %arg6: memref<128x128xbf16, #tpu.memory_space<vmem>>, %arg7: memref<1x128xf32, #tpu.memory_space<vmem>>, %arg8: memref<16x128xf32, #tpu.memory_space<vmem>>) attributes {dimension_semantics = [#tpu.dimension_semantics<parallel>], iteration_bounds = array<i64: 1>, scalar_prefetch = 0 : i64, scratch_operands = 0 : i64, tpu.core_type = #tpu.core_type<tc>, window_params = [{transform_indices = @transform_0, window_bounds = array<i64: 16, 32>}, {pipeline_mode = #tpu.pipeline_mode<synchronous>, transform_indices = @transform_1, window_bounds = array<i64: 32, 128>}, {pipeline_mode = #tpu.pipeline_mode<synchronous>, transform_indices = @transform_2, window_bounds = array<i64: 1, 128>}, {pipeline_mode = #tpu.pipeline_mode<synchronous>, transform_indices = @transform_3, window_bounds = array<i64: 128, 128>}, {pipeline_mode = #tpu.pipeline_mode<synchronous>, transform_indices = @transform_4, window_bounds = array<i64: 1, 128>}, {pipeline_mode = #tpu.pipeline_mode<synchronous>, transform_indices = @transform_5, window_bounds = array<i64: 128, 128>}, {pipeline_mode = #tpu.pipeline_mode<synchronous>, transform_indices = @transform_6, window_bounds = array<i64: 1, 128>}, {transform_indices = @transform_7, window_bounds = array<i64: 16, 128>}]} {
    %c0 = arith.constant 0 : index
    %c0_0 = arith.constant 0 : index
    %0 = vector.load %arg1[%c0, %c0_0] : memref<16x32xbf16, #tpu.memory_space<vmem>>, vector<16x32xbf16>
    %c0_1 = arith.constant 0 : index
    %c0_2 = arith.constant 0 : index
    %1 = vector.load %arg2[%c0_1, %c0_2] : memref<32x128xbf16, #tpu.memory_space<vmem>>, vector<32x128xbf16>
    %c0_3 = arith.constant 0 : index
    %c0_4 = arith.constant 0 : index
    %2 = vector.load %arg3[%c0_3, %c0_4] : memref<1x128xf32, #tpu.memory_space<vmem>>, vector<1x128xf32>
    %cst = arith.constant dense<0.000000e+00> : vector<16x128xf32>
    %3 = tpu.matmul %0, %1, %cst {dimension_numbers = #tpu.dot_dimension_numbers<[1], [0], [0], [1], [0, 0, 1, 1], [], []>} : vector<16x32xbf16>, vector<32x128xbf16>, vector<16x128xf32> -> vector<16x128xf32>
    %4 = vector.broadcast %2 : vector<1x128xf32> to vector<16x128xf32>
    %5 = arith.addf %3, %4 : vector<16x128xf32>
    %cst_5 = arith.constant 0.000000e+00 : f32
    %6 = vector.broadcast %cst_5 : f32 to vector<16x128xf32>
    %7 = arith.maximumf %5, %6 : vector<16x128xf32>
    %c0_6 = arith.constant 0 : index
    %c0_7 = arith.constant 0 : index
    %8 = vector.load %arg4[%c0_6, %c0_7] : memref<128x128xbf16, #tpu.memory_space<vmem>>, vector<128x128xbf16>
    %c0_8 = arith.constant 0 : index
    %c0_9 = arith.constant 0 : index
    %9 = vector.load %arg5[%c0_8, %c0_9] : memref<1x128xf32, #tpu.memory_space<vmem>>, vector<1x128xf32>
    %10 = arith.truncf %7 : vector<16x128xf32> to vector<16x128xbf16>
    %cst_10 = arith.constant dense<0.000000e+00> : vector<16x128xf32>
    %11 = tpu.matmul %10, %8, %cst_10 {dimension_numbers = #tpu.dot_dimension_numbers<[1], [0], [0], [1], [0, 0, 1, 1], [], []>} : vector<16x128xbf16>, vector<128x128xbf16>, vector<16x128xf32> -> vector<16x128xf32>
    %12 = vector.broadcast %9 : vector<1x128xf32> to vector<16x128xf32>
    %13 = arith.addf %11, %12 : vector<16x128xf32>
    %cst_11 = arith.constant 0.000000e+00 : f32
    %14 = vector.broadcast %cst_11 : f32 to vector<16x128xf32>
    %15 = arith.maximumf %13, %14 : vector<16x128xf32>
    %c0_12 = arith.constant 0 : index
    %c0_13 = arith.constant 0 : index
    %16 = vector.load %arg6[%c0_12, %c0_13] : memref<128x128xbf16, #tpu.memory_space<vmem>>, vector<128x128xbf16>
    %c0_14 = arith.constant 0 : index
    %c0_15 = arith.constant 0 : index
    %17 = vector.load %arg7[%c0_14, %c0_15] : memref<1x128xf32, #tpu.memory_space<vmem>>, vector<1x128xf32>
    %18 = arith.truncf %15 : vector<16x128xf32> to vector<16x128xbf16>
    %cst_16 = arith.constant dense<0.000000e+00> : vector<16x128xf32>
    %19 = tpu.matmul %18, %16, %cst_16 {dimension_numbers = #tpu.dot_dimension_numbers<[1], [0], [0], [1], [0, 0, 1, 1], [], []>} : vector<16x128xbf16>, vector<128x128xbf16>, vector<16x128xf32> -> vector<16x128xf32>
    %20 = vector.broadcast %17 : vector<1x128xf32> to vector<16x128xf32>
    %21 = arith.addf %19, %20 : vector<16x128xf32>
    %c0_17 = arith.constant 0 : index
    %c0_18 = arith.constant 0 : index
    %22 = vector.load %arg8[%c0_17, %c0_18] : memref<16x128xf32, #tpu.memory_space<vmem>>, vector<16x128xf32>
    tpu.vector_store %arg8[%c0_17, %c0_18], %21 {strides = array<i32>} : memref<16x128xf32, #tpu.memory_space<vmem>>, vector<16x128xf32>,
    return
  }
  func.func @transform_0(%arg0: i32) -> (i32, i32) {
    %c0_i32 = arith.constant 0 : i32
    %c0_i32_0 = arith.constant 0 : i32
    return %arg0, %c0_i32 : i32, i32
  }
  func.func @transform_1(%arg0: i32) -> (i32, i32) {
    %c0_i32 = arith.constant 0 : i32
    %c0_i32_0 = arith.constant 0 : i32
    %c0_i32_1 = arith.constant 0 : i32
    return %c0_i32, %c0_i32_0 : i32, i32
  }
  func.func @transform_2(%arg0: i32) -> (i32, i32) {
    %c0_i32 = arith.constant 0 : i32
    %c0_i32_0 = arith.constant 0 : i32
    %c0_i32_1 = arith.constant 0 : i32
    return %c0_i32, %c0_i32_0 : i32, i32
  }
  func.func @transform_3(%arg0: i32) -> (i32, i32) {
    %c0_i32 = arith.constant 0 : i32
    %c0_i32_0 = arith.constant 0 : i32
    %c0_i32_1 = arith.constant 0 : i32
    return %c0_i32, %c0_i32_0 : i32, i32
  }
  func.func @transform_4(%arg0: i32) -> (i32, i32) {
    %c0_i32 = arith.constant 0 : i32
    %c0_i32_0 = arith.constant 0 : i32
    %c0_i32_1 = arith.constant 0 : i32
    return %c0_i32, %c0_i32_0 : i32, i32
  }
  func.func @transform_5(%arg0: i32) -> (i32, i32) {
    %c0_i32 = arith.constant 0 : i32
    %c0_i32_0 = arith.constant 0 : i32
    %c0_i32_1 = arith.constant 0 : i32
    return %c0_i32, %c0_i32_0 : i32, i32
  }
  func.func @transform_6(%arg0: i32) -> (i32, i32) {
    %c0_i32 = arith.constant 0 : i32
    %c0_i32_0 = arith.constant 0 : i32
    %c0_i32_1 = arith.constant 0 : i32
    return %c0_i32, %c0_i32_0 : i32, i32
  }
  func.func @transform_7(%arg0: i32) -> (i32, i32) {
    %c0_i32 = arith.constant 0 : i32
    %c0_i32_0 = arith.constant 0 : i32
    return %arg0, %c0_i32 : i32, i32
  }
}

module attributes {stable_mosaic.version = 11 : i64} {
  func.func @_mlp_fused_kernel(%arg0: i32, %arg1: memref<16x32xbf16, #tpu.memory_space<vmem>>, %arg2: memref<32x128xbf16, #tpu.memory_space<vmem>>, %arg3: memref<1x128xf32, #tpu.memory_space<vmem>>, %arg4: memref<128x128xbf16, #tpu.memory_space<vmem>>, %arg5: memref<1x128xf32, #tpu.memory_space<vmem>>, %arg6: memref<128x128xbf16, #tpu.memory_space<vmem>>, %arg7: memref<1x128xf32, #tpu.memory_space<vmem>>, %arg8: memref<16x128xf32, #tpu.memory_space<vmem>>) attributes {dimension_semantics = [#tpu.dimension_semantics<parallel>], iteration_bounds = array<i64: 1>, scalar_prefetch = 0 : i64, scratch_operands = 0 : i64, tpu.core_type = #tpu.core_type<tc>, window_params = [{transform_indices = @transform_0, window_bounds = array<i64: 16, 32>}, {pipeline_mode = #tpu.pipeline_mode<synchronous>, transform_indices = @transform_1, window_bounds = array<i64: 32, 128>}, {pipeline_mode = #tpu.pipeline_mode<synchronous>, transform_indices = @transform_2, window_bounds = array<i64: 1, 128>}, {pipeline_mode = #tpu.pipeline_mode<synchronous>, transform_indices = @transform_3, window_bounds = array<i64: 128, 128>}, {pipeline_mode = #tpu.pipeline_mode<synchronous>, transform_indices = @transform_4, window_bounds = array<i64: 1, 128>}, {pipeline_mode = #tpu.pipeline_mode<synchronous>, transform_indices = @transform_5, window_bounds = array<i64: 128, 128>}, {pipeline_mode = #tpu.pipeline_mode<synchronous>, transform_indices = @transform_6, window_bounds = array<i64: 1, 128>}, {transform_indices = @transform_7, window_bounds = array<i64: 16, 128>}]} {
    %c0 = arith.constant 0 : index
    %c0_0 = arith.constant 0 : index
    %0 = vector.load %arg1[%c0, %c0_0] : memref<16x32xbf16, #tpu.memory_space<vmem>>, vector<16x32xbf16>
    %c0_1 = arith.constant 0 : index
    %c0_2 = arith.constant 0 : index
    %1 = vector.load %arg2[%c0_1, %c0_2] : memref<32x128xbf16, #tpu.memory_space<vmem>>, vector<32x128xbf16>
    %c0_3 = arith.constant 0 : index
    %c0_4 = arith.constant 0 : index
    %2 = vector.load %arg3[%c0_3, %c0_4] : memref<1x128xf32, #tpu.memory_space<vmem>>, vector<1x128xf32>
    %cst = arith.constant dense<0.000000e+00> : vector<16x128xf32>
    %3 = tpu.matmul %0, %1, %cst {dimension_numbers = #tpu.dot_dimension_numbers<[1], [0], [0], [1], [0, 0, 1, 1], [], []>} : vector<16x32xbf16>, vector<32x128xbf16>, vector<16x128xf32> -> vector<16x128xf32>
    %4 = vector.broadcast %2 : vector<1x128xf32> to vector<16x128xf32>
    %5 = arith.addf %3, %4 : vector<16x128xf32>
    %cst_5 = arith.constant 0.000000e+00 : f32
    %6 = vector.broadcast %cst_5 : f32 to vector<16x128xf32>
    %7 = arith.maximumf %5, %6 : vector<16x128xf32>
    %c0_6 = arith.constant 0 : index
    %c0_7 = arith.constant 0 : index
    %8 = vector.load %arg4[%c0_6, %c0_7] : memref<128x128xbf16, #tpu.memory_space<vmem>>, vector<128x128xbf16>
    %c0_8 = arith.constant 0 : index
    %c0_9 = arith.constant 0 : index
    %9 = vector.load %arg5[%c0_8, %c0_9] : memref<1x128xf32, #tpu.memory_space<vmem>>, vector<1x128xf32>
    %10 = arith.truncf %7 : vector<16x128xf32> to vector<16x128xbf16>
    %cst_10 = arith.constant dense<0.000000e+00> : vector<16x128xf32>
    %11 = tpu.matmul %10, %8, %cst_10 {dimension_numbers = #tpu.dot_dimension_numbers<[1], [0], [0], [1], [0, 0, 1, 1], [], []>} : vector<16x128xbf16>, vector<128x128xbf16>, vector<16x128xf32> -> vector<16x128xf32>
    %12 = vector.broadcast %9 : vector<1x128xf32> to vector<16x128xf32>
    %13 = arith.addf %11, %12 : vector<16x128xf32>
    %cst_11 = arith.constant 0.000000e+00 : f32
    %14 = vector.broadcast %cst_11 : f32 to vector<16x128xf32>
    %15 = arith.maximumf %13, %14 : vector<16x128xf32>
    %c0_12 = arith.constant 0 : index
    %c0_13 = arith.constant 0 : index
    %16 = vector.load %arg6[%c0_12, %c0_13] : memref<128x128xbf16, #tpu.memory_space<vmem>>, vector<128x128xbf16>
    %c0_14 = arith.constant 0 : index
    %c0_15 = arith.constant 0 : index
    %17 = vector.load %arg7[%c0_14, %c0_15] : memref<1x128xf32, #tpu.memory_space<vmem>>, vector<1x128xf32>
    %18 = arith.truncf %15 : vector<16x128xf32> to vector<16x128xbf16>
    %cst_16 = arith.constant dense<0.000000e+00> : vector<16x128xf32>
    %19 = tpu.matmul %18, %16, %cst_16 {dimension_numbers = #tpu.dot_dimension_numbers<[1], [0], [0], [1], [0, 0, 1, 1], [], []>} : vector<16x128xbf16>, vector<128x128xbf16>, vector<16x128xf32> -> vector<16x128xf32>
    %20 = vector.broadcast %17 : vector<1x128xf32> to vector<16x128xf32>
    %21 = arith.addf %19, %20 : vector<16x128xf32>
    %c0_17 = arith.constant 0 : index
    %c0_18 = arith.constant 0 : index
    %22 = vector.load %arg8[%c0_17, %c0_18] : memref<16x128xf32, #tpu.memory_space<vmem>>, vector<16x128xf32>
    tpu.vector_store %arg8[%c0_17, %c0_18], %21 {strides = array<i32>} : memref<16x128xf32, #tpu.memory_space<vmem>>, vector<16x128xf32>,
    return
  }
  func.func @transform_0(%arg0: i32) -> (i32, i32) {
    %c0_i32 = arith.constant 0 : i32
    %c0_i32_0 = arith.constant 0 : i32
    return %arg0, %c0_i32 : i32, i32
  }
  func.func @transform_1(%arg0: i32) -> (i32, i32) {
    %c0_i32 = arith.constant 0 : i32
    %c0_i32_0 = arith.constant 0 : i32
    %c0_i32_1 = arith.constant 0 : i32
    return %c0_i32, %c0_i32_0 : i32, i32
  }
  func.func @transform_2(%arg0: i32) -> (i32, i32) {
    %c0_i32 = arith.constant 0 : i32
    %c0_i32_0 = arith.constant 0 : i32
    %c0_i32_1 = arith.constant 0 : i32
    return %c0_i32, %c0_i32_0 : i32, i32
  }
  func.func @transform_3(%arg0: i32) -> (i32, i32) {
    %c0_i32 = arith.constant 0 : i32
    %c0_i32_0 = arith.constant 0 : i32
    %c0_i32_1 = arith.constant 0 : i32
    return %c0_i32, %c0_i32_0 : i32, i32
  }
  func.func @transform_4(%arg0: i32) -> (i32, i32) {
    %c0_i32 = arith.constant 0 : i32
    %c0_i32_0 = arith.constant 0 : i32
    %c0_i32_1 = arith.constant 0 : i32
    return %c0_i32, %c0_i32_0 : i32, i32
  }
  func.func @transform_5(%arg0: i32) -> (i32, i32) {
    %c0_i32 = arith.constant 0 : i32
    %c0_i32_0 = arith.constant 0 : i32
    %c0_i32_1 = arith.constant 0 : i32
    return %c0_i32, %c0_i32_0 : i32, i32
  }
  func.func @transform_6(%arg0: i32) -> (i32, i32) {
    %c0_i32 = arith.constant 0 : i32
    %c0_i32_0 = arith.constant 0 : i32
    %c0_i32_1 = arith.constant 0 : i32
    return %c0_i32, %c0_i32_0 : i32, i32
  }
  func.func @transform_7(%arg0: i32) -> (i32, i32) {
    %c0_i32 = arith.constant 0 : i32
    %c0_i32_0 = arith.constant 0 : i32
    return %arg0, %c0_i32 : i32, i32
  }
}

</mosaic_0001>

<llo_original>
// kernel: tpu_custom_call.1
$region0: #{tpu_custom_call.1}
  #allocation0 [shape = 'u32[]', space=smem, size = 0x4, offset = 0x4, fixed_abs, tag = 'smem constant byte address 0x4 - core index']
  #allocation1 [shape = 'u32[72,128]{1,0:T(1,128)}', space=vmem, size = 0x9000, scoped, tag = 'internal scratch']
  %s0 = inlined_call_operand.hbm [shape: bf16[16,32], index: 0, kind: input, shape index: {}]
  %s1 = inlined_call_operand.hbm [shape: bf16[32,128], index: 1, kind: input, shape index: {}]
  %s2 = inlined_call_operand.vmem [shape: f32[1,128], index: 2, kind: input, shape index: {}]
  %s3 = inlined_call_operand.hbm [shape: bf16[128,128], index: 3, kind: input, shape index: {}]
  %s4 = inlined_call_operand.vmem [shape: f32[1,128], index: 4, kind: input, shape index: {}]
  %s5 = inlined_call_operand.hbm [shape: bf16[128,128], index: 5, kind: input, shape index: {}]
  %s6 = inlined_call_operand.vmem [shape: f32[1,128], index: 6, kind: input, shape index: {}]
  %s7 = inlined_call_operand.hbm [shape: f32[16,128], index: 7, kind: output, shape index: {}]
  %s8 = sld [smem:[#allocation0]]
  $region54: #{tpu_custom_call.1} parent=0
    _
  %s10 = ssub.s32 1, %s8
  %s11 = scalar_select 0, %s10, %s8
  $region1: #{tpu_custom_call.1} parent=0
    #allocation2 [shape = 'u8[4096]{0}', space=vmem, size = 0x1000, scoped, tag = 'input window, operand 0, single buffered']
    #allocation3 [shape = 's32[1]{0}', space=sflag, size = 0x4, scoped, tag = 'scoped memory for tpu_custom_call.1']
    #allocation4 [shape = 's32[1]{0}', space=sflag, size = 0x4, scoped, tag = 'scoped memory for tpu_custom_call.1']
    #allocation5 [shape = 'u8[8192]{0}', space=vmem, size = 0x2000, scoped, tag = 'input window, operand 1, single buffered']
    #allocation6 [shape = 's32[1]{0}', space=sflag, size = 0x4, scoped, tag = 'scoped memory for tpu_custom_call.1']
    #allocation7 [shape = 'u8[32768]{0}', space=vmem, size = 0x8000, scoped, tag = 'input window, operand 3, single buffered']
    #allocation8 [shape = 'u8[32768]{0}', space=vmem, size = 0x8000, scoped, tag = 'input window, operand 5, single buffered']
    #allocation9 [shape = 's32[1]{0}', space=sflag, size = 0x4, scoped, tag = 'scoped memory for tpu_custom_call.1']
    #allocation10 [shape = 'u8[8192]{0}', space=vmem, size = 0x2000, scoped, tag = 'output window, operand 0, single buffered']
    %12 = vsyncpa [#allocation3], 0
    %13 = vsyncpa [#allocation6], 0
    %14 = vsyncpa [#allocation9], 0
    %15 = vsyncpa [#allocation4], 0
    // Predicated region
    $region2: #{tpu_custom_call.1} parent=1 // pred_check
      _
    $region3: #{tpu_custom_call.1} parent=1 // pred_check_branch
      %17 = sbr.rel (0) target = $region5
    $region4: #{tpu_custom_call.1} parent=1 // pred_region
      %19 = vsyncadd [#allocation3], 0
      %s20 = sshll.u32 %s0, 4
      %s21 = int_to_ptr.hbm [resolvable:$true] %s20
      %s22 = sshll.u32 [#allocation2], 4
      %s23 = int_to_ptr.vmem [resolvable:$true] %s22
      %28 = dma.hbm_to_vmem [thread:$0]  %s21, 128, %s23, [#allocation3], 64, 64, 4
    $region5: #{tpu_custom_call.1} parent=1 // pred_fallthru
      _
    // Predicated region
    $region6: #{tpu_custom_call.1} parent=1 // pred_check
      _
    $region7: #{tpu_custom_call.1} parent=1 // pred_check_branch
      %30 = sbr.rel (0) target = $region9
    $region8: #{tpu_custom_call.1} parent=1 // pred_region
      %32 = vsyncadd [#allocation6], 0
      %s33 = sshll.u32 %s1, 4
      %s34 = int_to_ptr.hbm [resolvable:$true] %s33
      %s35 = sshll.u32 [#allocation5], 4
      %s36 = int_to_ptr.vmem [resolvable:$true] %s35
      %41 = dma.hbm_to_vmem [thread:$0]  %s34, 256, %s36, [#allocation6], 64, 64, 4
    $region9: #{tpu_custom_call.1} parent=1 // pred_fallthru
      _
    // Predicated region
    $region10: #{tpu_custom_call.1} parent=1 // pred_check
      _
    $region11: #{tpu_custom_call.1} parent=1 // pred_check_branch
      %43 = sbr.rel (0) target = $region13
    $region12: #{tpu_custom_call.1} parent=1 // pred_region
      _
    $region13: #{tpu_custom_call.1} parent=1 // pred_fallthru
      _
    // Predicated region
    $region14: #{tpu_custom_call.1} parent=1 // pred_check
      _
    $region15: #{tpu_custom_call.1} parent=1 // pred_check_branch
      %45 = sbr.rel (0) target = $region17
    $region16: #{tpu_custom_call.1} parent=1 // pred_region
      %47 = vsyncadd [#allocation6], 0
      %s48 = sshll.u32 %s3, 4
      %s49 = int_to_ptr.hbm [resolvable:$true] %s48
      %s50 = sshll.u32 [#allocation7], 4
      %s51 = int_to_ptr.vmem [resolvable:$true] %s50
      %56 = dma.hbm_to_vmem [thread:$0]  %s49, 1024, %s51, [#allocation6], 64, 64, 4
    $region17: #{tpu_custom_call.1} parent=1 // pred_fallthru
      _
    // Predicated region
    $region18: #{tpu_custom_call.1} parent=1 // pred_check
      _
    $region19: #{tpu_custom_call.1} parent=1 // pred_check_branch
      %58 = sbr.rel (0) target = $region21
    $region20: #{tpu_custom_call.1} parent=1 // pred_region
      _
    $region21: #{tpu_custom_call.1} parent=1 // pred_fallthru
      _
    // Predicated region
    $region22: #{tpu_custom_call.1} parent=1 // pred_check
      _
    $region23: #{tpu_custom_call.1} parent=1 // pred_check_branch
      %60 = sbr.rel (0) target = $region25
    $region24: #{tpu_custom_call.1} parent=1 // pred_region
      %62 = vsyncadd [#allocation9], 0
      %s63 = sshll.u32 %s5, 4
      %s64 = int_to_ptr.hbm [resolvable:$true] %s63
      %s65 = sshll.u32 [#allocation8], 4
      %s66 = int_to_ptr.vmem [resolvable:$true] %s65
      %71 = dma.hbm_to_vmem [thread:$0]  %s64, 1024, %s66, [#allocation9], 64, 64, 4
    $region25: #{tpu_custom_call.1} parent=1 // pred_fallthru
      _
    // Predicated region
    $region26: #{tpu_custom_call.1} parent=1 // pred_check
      _
    $region27: #{tpu_custom_call.1} parent=1 // pred_check_branch
      %73 = sbr.rel (0) target = $region29
    $region28: #{tpu_custom_call.1} parent=1 // pred_region
      _
    $region29: #{tpu_custom_call.1} parent=1 // pred_fallthru
      _
    // Predicated region
    $region30: #{tpu_custom_call.1} parent=1 // pred_check
      _
    $region31: #{tpu_custom_call.1} parent=1 // pred_check_branch
      %75 = sbr.rel (0) target = $region33
    $region32: #{tpu_custom_call.1} parent=1 // pred_region
      %77 = dma.done [#allocation3], 128
    $region33: #{tpu_custom_call.1} parent=1 // pred_fallthru
      _
    // Predicated region
    $region34: #{tpu_custom_call.1} parent=1 // pred_check
      _
    $region35: #{tpu_custom_call.1} parent=1 // pred_check_branch
      %79 = sbr.rel (0) target = $region37
    $region36: #{tpu_custom_call.1} parent=1 // pred_region
      %81 = dma.done [#allocation6], 256
    $region37: #{tpu_custom_call.1} parent=1 // pred_fallthru
      _
    // Predicated region
    $region38: #{tpu_custom_call.1} parent=1 // pred_check
      _
    $region39: #{tpu_custom_call.1} parent=1 // pred_check_branch
      %83 = sbr.rel (0) target = $region41
    $region40: #{tpu_custom_call.1} parent=1 // pred_region
      %85 = dma.done [#allocation6], 1024
    $region41: #{tpu_custom_call.1} parent=1 // pred_fallthru
      _
    // Predicated region
    $region42: #{tpu_custom_call.1} parent=1 // pred_check
      _
    $region43: #{tpu_custom_call.1} parent=1 // pred_check_branch
      %87 = sbr.rel (0) target = $region45
    $region44: #{tpu_custom_call.1} parent=1 // pred_region
      %89 = dma.done [#allocation9], 1024
    $region45: #{tpu_custom_call.1} parent=1 // pred_fallthru
      _
    %v91 = vld [vmem:[#allocation2] sm:$0xf]
    %v92 = vld [vmem:[#allocation2 + $0x4] sm:$0xf]
    %v93 = vld [vmem:[#allocation5] sm:$0xf]
    %v94 = vld [vmem:[#allocation5 + $0x4] sm:$0xf]
    %v95 = vld [vmem:[#allocation5 + $0x8] sm:$0xf]
    %v96 = vld [vmem:[#allocation5 + $0xc] sm:$0xf]
    %v97 = vld [vmem:[%s2] sm:$0x1]
    %v99 = vperm.slane %v97, 0
    %v103 = vunpack.c.l.b16 %v91
    %v104 = vunpack.c.l.b16 %v92
    %v105 = vpack.c.b16 %v104, %v103
    %v110 = vunpack.c.l.b16 %v93
    %v111 = vunpack.c.l.b16 %v94
    %v112 = vunpack.c.l.b16 %v95
    %v113 = vunpack.c.l.b16 %v96
    %v114 = vpack.c.b16 %v111, %v110
    %v115 = vpack.c.b16 %v113, %v112
    %vm118 = vcmask 261120
    %v120 = vsel %vm118, %v105, 0
    %122 = vmatpush.bf16.msra.mxu0 0
    %123 = vmatpush.bf16.msra.mxu0 0
    %124 = vmatpush.bf16.msra.mxu0 0
    %125 = vmatpush.bf16.msra.mxu0 0
    %126 = vmatpush.bf16.msra.mxu0 0
    %127 = vmatpush.bf16.msra.mxu0 0
    %128 = vmatpush.bf16.msra.mxu0 %v115
    %129 = vmatpush.bf16.msra.mxu0 %v114
    %130 = vmatmul.bf16.gmra.mxu0 %v120
    %v131 = vpop.f32.mrf.mxu0
    %v132 = vadd.f32 %v99, %v131
    %v133 = vpop.f32.mrf.mxu0
    %v134 = vadd.f32 %v99, %v133
    %135 = vdwg.mxu0
    %v136 = vmax.f32 %v132, 0.0
    %v137 = vmax.f32 %v134, 0.0
    %v138 = vld [vmem:[#allocation7] sm:$0xf]
    %v139 = vld [vmem:[#allocation7 + $0x4] sm:$0xf]
    %v140 = vld [vmem:[#allocation7 + $0x8] sm:$0xf]
    %v141 = vld [vmem:[#allocation7 + $0xc] sm:$0xf]
    %v142 = vld [vmem:[#allocation7 + $0x10] sm:$0xf]
    %v143 = vld [vmem:[#allocation7 + $0x14] sm:$0xf]
    %v144 = vld [vmem:[#allocation7 + $0x18] sm:$0xf]
    %v145 = vld [vmem:[#allocation7 + $0x1c] sm:$0xf]
    %v146 = vld [vmem:[#allocation7 + $0x20] sm:$0xf]
    %v147 = vld [vmem:[#allocation7 + $0x24] sm:$0xf]
    %v148 = vld [vmem:[#allocation7 + $0x28] sm:$0xf]
    %v149 = vld [vmem:[#allocation7 + $0x2c] sm:$0xf]
    %v150 = vld [vmem:[#allocation7 + $0x30] sm:$0xf]
    %v151 = vld [vmem:[#allocation7 + $0x34] sm:$0xf]
    %v152 = vld [vmem:[#allocation7 + $0x38] sm:$0xf]
    %v153 = vld [vmem:[#allocation7 + $0x3c] sm:$0xf]
    %v154 = vld [vmem:[%s4] sm:$0x1]
    %v155 = vpack.c.bf16 %v137, %v136
    %v157 = vperm.slane %v154, 0
    %v175 = vunpack.c.l.b16 %v138
    %v176 = vunpack.c.l.b16 %v139
    %v177 = vunpack.c.l.b16 %v140
    %v178 = vunpack.c.l.b16 %v141
    %v179 = vunpack.c.l.b16 %v142
    %v180 = vunpack.c.l.b16 %v143
    %v181 = vunpack.c.l.b16 %v144
    %v182 = vunpack.c.l.b16 %v145
    %v183 = vunpack.c.l.b16 %v146
    %v184 = vunpack.c.l.b16 %v147
    %v185 = vunpack.c.l.b16 %v148
    %v186 = vunpack.c.l.b16 %v149
    %v187 = vunpack.c.l.b16 %v150
    %v188 = vunpack.c.l.b16 %v151
    %v189 = vunpack.c.l.b16 %v152
    %v190 = vunpack.c.l.b16 %v153
    %v191 = vpack.c.b16 %v176, %v175
    %v192 = vpack.c.b16 %v178, %v177
    %v193 = vpack.c.b16 %v180, %v179
    %v194 = vpack.c.b16 %v182, %v181
    %v195 = vpack.c.b16 %v184, %v183
    %v196 = vpack.c.b16 %v186, %v185
    %v197 = vpack.c.b16 %v188, %v187
    %v198 = vpack.c.b16 %v190, %v189
    %207 = vmatpush.bf16.msra.mxu0 %v198
    %208 = vmatpush.bf16.msra.mxu0 %v197
    %209 = vmatpush.bf16.msra.mxu0 %v196
    %210 = vmatpush.bf16.msra.mxu0 %v195
    %211 = vmatpush.bf16.msra.mxu0 %v194
    %212 = vmatpush.bf16.msra.mxu0 %v193
    %213 = vmatpush.bf16.msra.mxu0 %v192
    %214 = vmatpush.bf16.msra.mxu0 %v191
    %215 = vmatmul.bf16.gmra.mxu0 %v155
    %v216 = vpop.f32.mrf.mxu0
    %v217 = vadd.f32 %v157, %v216
    %v218 = vpop.f32.mrf.mxu0
    %v219 = vadd.f32 %v157, %v218
    %220 = vdwg.mxu0
    %v221 = vmax.f32 %v217, 0.0
    %v222 = vmax.f32 %v219, 0.0
    %v223 = vld [vmem:[#allocation8] sm:$0xf]
    %v224 = vld [vmem:[#allocation8 + $0x4] sm:$0xf]
    %v225 = vld [vmem:[#allocation8 + $0x8] sm:$0xf]
    %v226 = vld [vmem:[#allocation8 + $0xc] sm:$0xf]
    %v227 = vld [vmem:[#allocation8 + $0x10] sm:$0xf]
    %v228 = vld [vmem:[#allocation8 + $0x14] sm:$0xf]
    %v229 = vld [vmem:[#allocation8 + $0x18] sm:$0xf]
    %v230 = vld [vmem:[#allocation8 + $0x1c] sm:$0xf]
    %v231 = vld [vmem:[#allocation8 + $0x20] sm:$0xf]
    %v232 = vld [vmem:[#allocation8 + $0x24] sm:$0xf]
    %v233 = vld [vmem:[#allocation8 + $0x28] sm:$0xf]
    %v234 = vld [vmem:[#allocation8 + $0x2c] sm:$0xf]
    %v235 = vld [vmem:[#allocation8 + $0x30] sm:$0xf]
    %v236 = vld [vmem:[#allocation8 + $0x34] sm:$0xf]
    %v237 = vld [vmem:[#allocation8 + $0x38] sm:$0xf]
    %v238 = vld [vmem:[#allocation8 + $0x3c] sm:$0xf]
    %v239 = vld [vmem:[%s6] sm:$0x1]
    %v240 = vpack.c.bf16 %v222, %v221
    %v242 = vperm.slane %v239, 0
    %v260 = vunpack.c.l.b16 %v223
    %v261 = vunpack.c.l.b16 %v224
    %v262 = vunpack.c.l.b16 %v225
    %v263 = vunpack.c.l.b16 %v226
    %v264 = vunpack.c.l.b16 %v227
    %v265 = vunpack.c.l.b16 %v228
    %v266 = vunpack.c.l.b16 %v229
    %v267 = vunpack.c.l.b16 %v230
    %v268 = vunpack.c.l.b16 %v231
    %v269 = vunpack.c.l.b16 %v232
    %v270 = vunpack.c.l.b16 %v233
    %v271 = vunpack.c.l.b16 %v234
    %v272 = vunpack.c.l.b16 %v235
    %v273 = vunpack.c.l.b16 %v236
    %v274 = vunpack.c.l.b16 %v237
    %v275 = vunpack.c.l.b16 %v238
    %v276 = vpack.c.b16 %v261, %v260
    %v277 = vpack.c.b16 %v263, %v262
    %v278 = vpack.c.b16 %v265, %v264
    %v279 = vpack.c.b16 %v267, %v266
    %v280 = vpack.c.b16 %v269, %v268
    %v281 = vpack.c.b16 %v271, %v270
    %v282 = vpack.c.b16 %v273, %v272
    %v283 = vpack.c.b16 %v275, %v274
    %292 = vmatpush.bf16.msra.mxu0 %v283
    %293 = vmatpush.bf16.msra.mxu0 %v282
    %294 = vmatpush.bf16.msra.mxu0 %v281
    %295 = vmatpush.bf16.msra.mxu0 %v280
    %296 = vmatpush.bf16.msra.mxu0 %v279
    %297 = vmatpush.bf16.msra.mxu0 %v278
    %298 = vmatpush.bf16.msra.mxu0 %v277
    %299 = vmatpush.bf16.msra.mxu0 %v276
    %300 = vmatmul.bf16.gmra.mxu0 %v240
    %v301 = vpop.f32.mrf.mxu0
    %v302 = vadd.f32 %v242, %v301
    %v303 = vpop.f32.mrf.mxu0
    %v304 = vadd.f32 %v242, %v303
    %305 = vdwg.mxu0
    %306 = vst [vmem:[#allocation10] sm:$0xff] %v302
    %307 = vst [vmem:[#allocation10 + $0x8] sm:$0xff] %v304
    // Predicated region
    $region46: #{tpu_custom_call.1} parent=1 // pred_check
      _
    $region47: #{tpu_custom_call.1} parent=1 // pred_check_branch
      %309 = sbr.rel (0) target = $region49
    $region48: #{tpu_custom_call.1} parent=1 // pred_region
      %311 = vsyncadd [#allocation4], 0
      %s312 = sshll.u32 [#allocation10], 4
      %s313 = int_to_ptr.vmem [resolvable:$true] %s312
      %s314 = sshll.u32 %s7, 4
      %s315 = int_to_ptr.hbm [resolvable:$true] %s314
      %320 = dma.vmem_to_hbm [thread:$0]  %s313, 256, %s315, [#allocation4], 128, 128, 8
    $region49: #{tpu_custom_call.1} parent=1 // pred_fallthru
      _
    // Predicated region
    $region50: #{tpu_custom_call.1} parent=1 // pred_check
      _
    $region51: #{tpu_custom_call.1} parent=1 // pred_check_branch
      %322 = sbr.rel (0) target = $region53
    $region52: #{tpu_custom_call.1} parent=1 // pred_region
      %324 = dma.done [#allocation4], 256
    $region53: #{tpu_custom_call.1} parent=1 // pred_fallthru
      _
    %325 = vsyncpa [#allocation3], 1
    %326 = vsyncpa [#allocation6], 1
    %327 = vsyncpa [#allocation9], 1
    %328 = vsyncpa [#allocation4], 1

// kernel: tpu_custom_call.1
$region0: #{tpu_custom_call.1}
  #allocation0 [shape = 'u32[]', space=smem, size = 0x4, offset = 0x4, fixed_abs, tag = 'smem constant byte address 0x4 - core index']
  #allocation1 [shape = 'u32[72,128]{1,0:T(1,128)}', space=vmem, size = 0x9000, scoped, tag = 'internal scratch']
  %s0 = inlined_call_operand.hbm [shape: bf16[16,32], index: 0, kind: input, shape index: {}]
  %s1 = inlined_call_operand.hbm [shape: bf16[32,128], index: 1, kind: input, shape index: {}]
  %s2 = inlined_call_operand.vmem [shape: f32[1,128], index: 2, kind: input, shape index: {}]
  %s3 = inlined_call_operand.hbm [shape: bf16[128,128], index: 3, kind: input, shape index: {}]
  %s4 = inlined_call_operand.vmem [shape: f32[1,128], index: 4, kind: input, shape index: {}]
  %s5 = inlined_call_operand.hbm [shape: bf16[128,128], index: 5, kind: input, shape index: {}]
  %s6 = inlined_call_operand.vmem [shape: f32[1,128], index: 6, kind: input, shape index: {}]
  %s7 = inlined_call_operand.hbm [shape: f32[16,128], index: 7, kind: output, shape index: {}]
  %s8 = sld [smem:[#allocation0]]
  $region54: #{tpu_custom_call.1} parent=0
    _
  %s10 = ssub.s32 1, %s8
  %s11 = scalar_select 0, %s10, %s8
  $region1: #{tpu_custom_call.1} parent=0
    #allocation2 [shape = 'u8[4096]{0}', space=vmem, size = 0x1000, scoped, tag = 'input window, operand 0, single buffered']
    #allocation3 [shape = 's32[1]{0}', space=sflag, size = 0x4, scoped, tag = 'scoped memory for tpu_custom_call.1']
    #allocation4 [shape = 's32[1]{0}', space=sflag, size = 0x4, scoped, tag = 'scoped memory for tpu_custom_call.1']
    #allocation5 [shape = 'u8[8192]{0}', space=vmem, size = 0x2000, scoped, tag = 'input window, operand 1, single buffered']
    #allocation6 [shape = 's32[1]{0}', space=sflag, size = 0x4, scoped, tag = 'scoped memory for tpu_custom_call.1']
    #allocation7 [shape = 'u8[32768]{0}', space=vmem, size = 0x8000, scoped, tag = 'input window, operand 3, single buffered']
    #allocation8 [shape = 'u8[32768]{0}', space=vmem, size = 0x8000, scoped, tag = 'input window, operand 5, single buffered']
    #allocation9 [shape = 's32[1]{0}', space=sflag, size = 0x4, scoped, tag = 'scoped memory for tpu_custom_call.1']
    #allocation10 [shape = 'u8[8192]{0}', space=vmem, size = 0x2000, scoped, tag = 'output window, operand 0, single buffered']
    %12 = vsyncpa [#allocation3], 0
    %13 = vsyncpa [#allocation6], 0
    %14 = vsyncpa [#allocation9], 0
    %15 = vsyncpa [#allocation4], 0
    // Predicated region
    $region2: #{tpu_custom_call.1} parent=1 // pred_check
      _
    $region3: #{tpu_custom_call.1} parent=1 // pred_check_branch
      %17 = sbr.rel (0) target = $region5
    $region4: #{tpu_custom_call.1} parent=1 // pred_region
      %19 = vsyncadd [#allocation3], 0
      %s20 = sshll.u32 %s0, 4
      %s21 = int_to_ptr.hbm [resolvable:$true] %s20
      %s22 = sshll.u32 [#allocation2], 4
      %s23 = int_to_ptr.vmem [resolvable:$true] %s22
      %28 = dma.hbm_to_vmem [thread:$0]  %s21, 128, %s23, [#allocation3], 64, 64, 4
    $region5: #{tpu_custom_call.1} parent=1 // pred_fallthru
      _
    // Predicated region
    $region6: #{tpu_custom_call.1} parent=1 // pred_check
      _
    $region7: #{tpu_custom_call.1} parent=1 // pred_check_branch
      %30 = sbr.rel (0) target = $region9
    $region8: #{tpu_custom_call.1} parent=1 // pred_region
      %32 = vsyncadd [#allocation6], 0
      %s33 = sshll.u32 %s1, 4
      %s34 = int_to_ptr.hbm [resolvable:$true] %s33
      %s35 = sshll.u32 [#allocation5], 4
      %s36 = int_to_ptr.vmem [resolvable:$true] %s35
      %41 = dma.hbm_to_vmem [thread:$0]  %s34, 256, %s36, [#allocation6], 64, 64, 4
    $region9: #{tpu_custom_call.1} parent=1 // pred_fallthru
      _
    // Predicated region
    $region10: #{tpu_custom_call.1} parent=1 // pred_check
      _
    $region11: #{tpu_custom_call.1} parent=1 // pred_check_branch
      %43 = sbr.rel (0) target = $region13
    $region12: #{tpu_custom_call.1} parent=1 // pred_region
      _
    $region13: #{tpu_custom_call.1} parent=1 // pred_fallthru
      _
    // Predicated region
    $region14: #{tpu_custom_call.1} parent=1 // pred_check
      _
    $region15: #{tpu_custom_call.1} parent=1 // pred_check_branch
      %45 = sbr.rel (0) target = $region17
    $region16: #{tpu_custom_call.1} parent=1 // pred_region
      %47 = vsyncadd [#allocation6], 0
      %s48 = sshll.u32 %s3, 4
      %s49 = int_to_ptr.hbm [resolvable:$true] %s48
      %s50 = sshll.u32 [#allocation7], 4
      %s51 = int_to_ptr.vmem [resolvable:$true] %s50
      %56 = dma.hbm_to_vmem [thread:$0]  %s49, 1024, %s51, [#allocation6], 64, 64, 4
    $region17: #{tpu_custom_call.1} parent=1 // pred_fallthru
      _
    // Predicated region
    $region18: #{tpu_custom_call.1} parent=1 // pred_check
      _
    $region19: #{tpu_custom_call.1} parent=1 // pred_check_branch
      %58 = sbr.rel (0) target = $region21
    $region20: #{tpu_custom_call.1} parent=1 // pred_region
      _
    $region21: #{tpu_custom_call.1} parent=1 // pred_fallthru
      _
    // Predicated region
    $region22: #{tpu_custom_call.1} parent=1 // pred_check
      _
    $region23: #{tpu_custom_call.1} parent=1 // pred_check_branch
      %60 = sbr.rel (0) target = $region25
    $region24: #{tpu_custom_call.1} parent=1 // pred_region
      %62 = vsyncadd [#allocation9], 0
      %s63 = sshll.u32 %s5, 4
      %s64 = int_to_ptr.hbm [resolvable:$true] %s63
      %s65 = sshll.u32 [#allocation8], 4
      %s66 = int_to_ptr.vmem [resolvable:$true] %s65
      %71 = dma.hbm_to_vmem [thread:$0]  %s64, 1024, %s66, [#allocation9], 64, 64, 4
    $region25: #{tpu_custom_call.1} parent=1 // pred_fallthru
      _
    // Predicated region
    $region26: #{tpu_custom_call.1} parent=1 // pred_check
      _
    $region27: #{tpu_custom_call.1} parent=1 // pred_check_branch
      %73 = sbr.rel (0) target = $region29
    $region28: #{tpu_custom_call.1} parent=1 // pred_region
      _
    $region29: #{tpu_custom_call.1} parent=1 // pred_fallthru
      _
    // Predicated region
    $region30: #{tpu_custom_call.1} parent=1 // pred_check
      _
    $region31: #{tpu_custom_call.1} parent=1 // pred_check_branch
      %75 = sbr.rel (0) target = $region33
    $region32: #{tpu_custom_call.1} parent=1 // pred_region
      %77 = dma.done [#allocation3], 128
    $region33: #{tpu_custom_call.1} parent=1 // pred_fallthru
      _
    // Predicated region
    $region34: #{tpu_custom_call.1} parent=1 // pred_check
      _
    $region35: #{tpu_custom_call.1} parent=1 // pred_check_branch
      %79 = sbr.rel (0) target = $region37
    $region36: #{tpu_custom_call.1} parent=1 // pred_region
      %81 = dma.done [#allocation6], 256
    $region37: #{tpu_custom_call.1} parent=1 // pred_fallthru
      _
    // Predicated region
    $region38: #{tpu_custom_call.1} parent=1 // pred_check
      _
    $region39: #{tpu_custom_call.1} parent=1 // pred_check_branch
      %83 = sbr.rel (0) target = $region41
    $region40: #{tpu_custom_call.1} parent=1 // pred_region
      %85 = dma.done [#allocation6], 1024
    $region41: #{tpu_custom_call.1} parent=1 // pred_fallthru
      _
    // Predicated region
    $region42: #{tpu_custom_call.1} parent=1 // pred_check
      _
    $region43: #{tpu_custom_call.1} parent=1 // pred_check_branch
      %87 = sbr.rel (0) target = $region45
    $region44: #{tpu_custom_call.1} parent=1 // pred_region
      %89 = dma.done [#allocation9], 1024
    $region45: #{tpu_custom_call.1} parent=1 // pred_fallthru
      _
    %v91 = vld [vmem:[#allocation2] sm:$0xf]
    %v92 = vld [vmem:[#allocation2 + $0x4] sm:$0xf]
    %v93 = vld [vmem:[#allocation5] sm:$0xf]
    %v94 = vld [vmem:[#allocation5 + $0x4] sm:$0xf]
    %v95 = vld [vmem:[#allocation5 + $0x8] sm:$0xf]
    %v96 = vld [vmem:[#allocation5 + $0xc] sm:$0xf]
    %v97 = vld [vmem:[%s2] sm:$0x1]
    %v99 = vperm.slane %v97, 0
    %v103 = vunpack.c.l.b16 %v91
    %v104 = vunpack.c.l.b16 %v92
    %v105 = vpack.c.b16 %v104, %v103
    %v110 = vunpack.c.l.b16 %v93
    %v111 = vunpack.c.l.b16 %v94
    %v112 = vunpack.c.l.b16 %v95
    %v113 = vunpack.c.l.b16 %v96
    %v114 = vpack.c.b16 %v111, %v110
    %v115 = vpack.c.b16 %v113, %v112
    %vm118 = vcmask 261120
    %v120 = vsel %vm118, %v105, 0
    %122 = vmatpush.bf16.msra.mxu0 0
    %123 = vmatpush.bf16.msra.mxu0 0
    %124 = vmatpush.bf16.msra.mxu0 0
    %125 = vmatpush.bf16.msra.mxu0 0
    %126 = vmatpush.bf16.msra.mxu0 0
    %127 = vmatpush.bf16.msra.mxu0 0
    %128 = vmatpush.bf16.msra.mxu0 %v115
    %129 = vmatpush.bf16.msra.mxu0 %v114
    %130 = vmatmul.bf16.gmra.mxu0 %v120
    %v131 = vpop.f32.mrf.mxu0
    %v132 = vadd.f32 %v99, %v131
    %v133 = vpop.f32.mrf.mxu0
    %v134 = vadd.f32 %v99, %v133
    %135 = vdwg.mxu0
    %v136 = vmax.f32 %v132, 0.0
    %v137 = vmax.f32 %v134, 0.0
    %v138 = vld [vmem:[#allocation7] sm:$0xf]
    %v139 = vld [vmem:[#allocation7 + $0x4] sm:$0xf]
    %v140 = vld [vmem:[#allocation7 + $0x8] sm:$0xf]
    %v141 = vld [vmem:[#allocation7 + $0xc] sm:$0xf]
    %v142 = vld [vmem:[#allocation7 + $0x10] sm:$0xf]
    %v143 = vld [vmem:[#allocation7 + $0x14] sm:$0xf]
    %v144 = vld [vmem:[#allocation7 + $0x18] sm:$0xf]
    %v145 = vld [vmem:[#allocation7 + $0x1c] sm:$0xf]
    %v146 = vld [vmem:[#allocation7 + $0x20] sm:$0xf]
    %v147 = vld [vmem:[#allocation7 + $0x24] sm:$0xf]
    %v148 = vld [vmem:[#allocation7 + $0x28] sm:$0xf]
    %v149 = vld [vmem:[#allocation7 + $0x2c] sm:$0xf]
    %v150 = vld [vmem:[#allocation7 + $0x30] sm:$0xf]
    %v151 = vld [vmem:[#allocation7 + $0x34] sm:$0xf]
    %v152 = vld [vmem:[#allocation7 + $0x38] sm:$0xf]
    %v153 = vld [vmem:[#allocation7 + $0x3c] sm:$0xf]
    %v154 = vld [vmem:[%s4] sm:$0x1]
    %v155 = vpack.c.bf16 %v137, %v136
    %v157 = vperm.slane %v154, 0
    %v175 = vunpack.c.l.b16 %v138
    %v176 = vunpack.c.l.b16 %v139
    %v177 = vunpack.c.l.b16 %v140
    %v178 = vunpack.c.l.b16 %v141
    %v179 = vunpack.c.l.b16 %v142
    %v180 = vunpack.c.l.b16 %v143
    %v181 = vunpack.c.l.b16 %v144
    %v182 = vunpack.c.l.b16 %v145
    %v183 = vunpack.c.l.b16 %v146
    %v184 = vunpack.c.l.b16 %v147
    %v185 = vunpack.c.l.b16 %v148
    %v186 = vunpack.c.l.b16 %v149
    %v187 = vunpack.c.l.b16 %v150
    %v188 = vunpack.c.l.b16 %v151
    %v189 = vunpack.c.l.b16 %v152
    %v190 = vunpack.c.l.b16 %v153
    %v191 = vpack.c.b16 %v176, %v175
    %v192 = vpack.c.b16 %v178, %v177
    %v193 = vpack.c.b16 %v180, %v179
    %v194 = vpack.c.b16 %v182, %v181
    %v195 = vpack.c.b16 %v184, %v183
    %v196 = vpack.c.b16 %v186, %v185
    %v197 = vpack.c.b16 %v188, %v187
    %v198 = vpack.c.b16 %v190, %v189
    %207 = vmatpush.bf16.msra.mxu0 %v198
    %208 = vmatpush.bf16.msra.mxu0 %v197
    %209 = vmatpush.bf16.msra.mxu0 %v196
    %210 = vmatpush.bf16.msra.mxu0 %v195
    %211 = vmatpush.bf16.msra.mxu0 %v194
    %212 = vmatpush.bf16.msra.mxu0 %v193
    %213 = vmatpush.bf16.msra.mxu0 %v192
    %214 = vmatpush.bf16.msra.mxu0 %v191
    %215 = vmatmul.bf16.gmra.mxu0 %v155
    %v216 = vpop.f32.mrf.mxu0
    %v217 = vadd.f32 %v157, %v216
    %v218 = vpop.f32.mrf.mxu0
    %v219 = vadd.f32 %v157, %v218
    %220 = vdwg.mxu0
    %v221 = vmax.f32 %v217, 0.0
    %v222 = vmax.f32 %v219, 0.0
    %v223 = vld [vmem:[#allocation8] sm:$0xf]
    %v224 = vld [vmem:[#allocation8 + $0x4] sm:$0xf]
    %v225 = vld [vmem:[#allocation8 + $0x8] sm:$0xf]
    %v226 = vld [vmem:[#allocation8 + $0xc] sm:$0xf]
    %v227 = vld [vmem:[#allocation8 + $0x10] sm:$0xf]
    %v228 = vld [vmem:[#allocation8 + $0x14] sm:$0xf]
    %v229 = vld [vmem:[#allocation8 + $0x18] sm:$0xf]
    %v230 = vld [vmem:[#allocation8 + $0x1c] sm:$0xf]
    %v231 = vld [vmem:[#allocation8 + $0x20] sm:$0xf]
    %v232 = vld [vmem:[#allocation8 + $0x24] sm:$0xf]
    %v233 = vld [vmem:[#allocation8 + $0x28] sm:$0xf]
    %v234 = vld [vmem:[#allocation8 + $0x2c] sm:$0xf]
    %v235 = vld [vmem:[#allocation8 + $0x30] sm:$0xf]
    %v236 = vld [vmem:[#allocation8 + $0x34] sm:$0xf]
    %v237 = vld [vmem:[#allocation8 + $0x38] sm:$0xf]
    %v238 = vld [vmem:[#allocation8 + $0x3c] sm:$0xf]
    %v239 = vld [vmem:[%s6] sm:$0x1]
    %v240 = vpack.c.bf16 %v222, %v221
    %v242 = vperm.slane %v239, 0
    %v260 = vunpack.c.l.b16 %v223
    %v261 = vunpack.c.l.b16 %v224
    %v262 = vunpack.c.l.b16 %v225
    %v263 = vunpack.c.l.b16 %v226
    %v264 = vunpack.c.l.b16 %v227
    %v265 = vunpack.c.l.b16 %v228
    %v266 = vunpack.c.l.b16 %v229
    %v267 = vunpack.c.l.b16 %v230
    %v268 = vunpack.c.l.b16 %v231
    %v269 = vunpack.c.l.b16 %v232
    %v270 = vunpack.c.l.b16 %v233
    %v271 = vunpack.c.l.b16 %v234
    %v272 = vunpack.c.l.b16 %v235
    %v273 = vunpack.c.l.b16 %v236
    %v274 = vunpack.c.l.b16 %v237
    %v275 = vunpack.c.l.b16 %v238
    %v276 = vpack.c.b16 %v261, %v260
    %v277 = vpack.c.b16 %v263, %v262
    %v278 = vpack.c.b16 %v265, %v264
    %v279 = vpack.c.b16 %v267, %v266
    %v280 = vpack.c.b16 %v269, %v268
    %v281 = vpack.c.b16 %v271, %v270
    %v282 = vpack.c.b16 %v273, %v272
    %v283 = vpack.c.b16 %v275, %v274
    %292 = vmatpush.bf16.msra.mxu0 %v283
    %293 = vmatpush.bf16.msra.mxu0 %v282
    %294 = vmatpush.bf16.msra.mxu0 %v281
    %295 = vmatpush.bf16.msra.mxu0 %v280
    %296 = vmatpush.bf16.msra.mxu0 %v279
    %297 = vmatpush.bf16.msra.mxu0 %v278
    %298 = vmatpush.bf16.msra.mxu0 %v277
    %299 = vmatpush.bf16.msra.mxu0 %v276
    %300 = vmatmul.bf16.gmra.mxu0 %v240
    %v301 = vpop.f32.mrf.mxu0
    %v302 = vadd.f32 %v242, %v301
    %v303 = vpop.f32.mrf.mxu0
    %v304 = vadd.f32 %v242, %v303
    %305 = vdwg.mxu0
    %306 = vst [vmem:[#allocation10] sm:$0xff] %v302
    %307 = vst [vmem:[#allocation10 + $0x8] sm:$0xff] %v304
    // Predicated region
    $region46: #{tpu_custom_call.1} parent=1 // pred_check
      _
    $region47: #{tpu_custom_call.1} parent=1 // pred_check_branch
      %309 = sbr.rel (0) target = $region49
    $region48: #{tpu_custom_call.1} parent=1 // pred_region
      %311 = vsyncadd [#allocation4], 0
      %s312 = sshll.u32 [#allocation10], 4
      %s313 = int_to_ptr.vmem [resolvable:$true] %s312
      %s314 = sshll.u32 %s7, 4
      %s315 = int_to_ptr.hbm [resolvable:$true] %s314
      %320 = dma.vmem_to_hbm [thread:$0]  %s313, 256, %s315, [#allocation4], 128, 128, 8
    $region49: #{tpu_custom_call.1} parent=1 // pred_fallthru
      _
    // Predicated region
    $region50: #{tpu_custom_call.1} parent=1 // pred_check
      _
    $region51: #{tpu_custom_call.1} parent=1 // pred_check_branch
      %322 = sbr.rel (0) target = $region53
    $region52: #{tpu_custom_call.1} parent=1 // pred_region
      %324 = dma.done [#allocation4], 256
    $region53: #{tpu_custom_call.1} parent=1 // pred_fallthru
      _
    %325 = vsyncpa [#allocation3], 1
    %326 = vsyncpa [#allocation6], 1
    %327 = vsyncpa [#allocation9], 1
    %328 = vsyncpa [#allocation4], 1

</llo_original>
